<compile_context>
chip_gen: v5e
topology: v5e:2x2
jax: 0.10.0
libtpu: 0.0.40
codegen_flags: <defaults>
</compile_context>

<pallas_src>
import jax
import jax.numpy as jnp
from jax.experimental import pallas as pl
from jax.experimental.pallas import tpu as pltpu

# Model dimensions (fixed by ApexModel).
IN, HID, OUT = 32, 64, 32

# Above this many rows, switch from the single-shot whole-array-in-VMEM path
# to a tiled "parallel" grid over M (keeps VMEM bounded, shards across TCs).
SINGLE_SHOT_MAX_M = 4096
TILE_M = 512


def _round8(n: int) -> int:
    return (n + 7) // 8 * 8


# Row layout of the packed (N_ROWS, HID) fp32 parameter slab; every section
# starts on an 8-row (sublane-tile) boundary so in-kernel static slices are
# free views (no tile-boundary-crossing copies).
ROW_W1T = 0                          # rows [0, 32)   : w1^T, shape (IN, HID)
ROW_B1 = _round8(ROW_W1T + IN)       # row  32        : b1,   shape (HID,)
ROW_W2T = _round8(ROW_B1 + 1)        # rows [40, 104) : w2^T, shape (HID, OUT) in lanes [0, OUT)
ROW_B2 = _round8(ROW_W2T + HID)      # row  104       : b2 in lanes [0, OUT)
N_ROWS = _round8(ROW_B2 + 1)         # 112 rows total (~28 KB fp32)


def pack_apex_params(w1, b1, w2, b2):
    """One-time (init-time) packing of all parameters into a single slab.

    w1: (HID, IN), b1: (HID,), w2: (OUT, HID), b2: (OUT,)  -- PyTorch layout.
    Both weights are pre-transposed here so the kernel does two plain
    row-major jnp.dot's with no per-call re-orientation.
    """
    p = jnp.zeros((N_ROWS, HID), dtype=jnp.float32)
    p = p.at[ROW_W1T:ROW_W1T + IN, :].set(w1.T.astype(jnp.float32))      # (IN, HID)
    p = p.at[ROW_B1, :].set(b1.astype(jnp.float32))                      # (HID,)
    p = p.at[ROW_W2T:ROW_W2T + HID, :OUT].set(w2.T.astype(jnp.float32))  # (HID, OUT)
    p = p.at[ROW_B2, :OUT].set(b2.astype(jnp.float32))                   # (OUT,)
    return p


def _fused_mlp_kernel(x_ref, p_ref, o_ref):
    # Static views into the packed parameter slab (no extra DMAs).
    w1t = p_ref[ROW_W1T:ROW_W1T + IN, :]            # (IN, HID)
    b1 = p_ref[ROW_B1:ROW_B1 + 1, :]                # (1, HID)
    w2t = p_ref[ROW_W2T:ROW_W2T + HID, 0:OUT]       # (HID, OUT) -- pre-transposed
    b2 = p_ref[ROW_B2:ROW_B2 + 1, 0:OUT]            # (1, OUT)

    # fc1 (ColumnParallelLinear 32->64) + bias + ReLU  (f32 elementwise: v5e-safe)
    h = jnp.dot(x_ref[...], w1t, preferred_element_type=jnp.float32) + b1
    h = jnp.maximum(h, 0.0)

    # fc2 (RowParallelLinear 64->32) + bias; plain matmul, no transpose needed.
    y = jnp.dot(h, w2t, preferred_element_type=jnp.float32) + b2

    o_ref[...] = y.astype(o_ref.dtype)


def _cost_estimate(m: int) -> pl.CostEstimate:
    return pl.CostEstimate(
        flops=2 * m * (IN * HID + HID * OUT),
        transcendentals=0,
        bytes_accessed=4 * (m * IN + N_ROWS * HID + m * OUT),
    )


@jax.jit
def apex_model_forward(x, packed_params):
    """x: (B, S, 32) float32, packed_params: (112, 64) float32 from pack_apex_params."""
    B, S, in_dim = x.shape
    assert in_dim == IN
    M = B * S
    x2d = x.reshape(M, IN)

    if M <= SINGLE_SHOT_MAX_M:
        # Single-shot: no grid, whole arrays resident in VMEM, 2 input DMAs.
        out2d = pl.pallas_call(
            _fused_mlp_kernel,
            out_shape=jax.ShapeDtypeStruct((M, OUT), jnp.float32),
            in_specs=[
                pl.BlockSpec(memory_space=pltpu.MemorySpace.VMEM),
                pl.BlockSpec(memory_space=pltpu.MemorySpace.VMEM),
            ],
            out_specs=pl.BlockSpec(memory_space=pltpu.MemorySpace.VMEM),
            cost_estimate=_cost_estimate(M),
        )(x2d, packed_params)
    else:
        # Large-M path: 1-D parallel grid over rows; param slab stays resident
        # (constant index_map). Bounds VMEM and shards rows across TensorCores.
        Mp = pl.cdiv(M, TILE_M) * TILE_M
        x2d_p = jnp.zeros((Mp, IN), jnp.float32).at[:M, :].set(x2d)
        out2d = pl.pallas_call(
            _fused_mlp_kernel,
            out_shape=jax.ShapeDtypeStruct((Mp, OUT), jnp.float32),
            grid=(Mp // TILE_M,),
            in_specs=[
                pl.BlockSpec((TILE_M, IN), lambda i: (i, 0)),
                pl.BlockSpec((N_ROWS, HID), lambda i: (0, 0)),
            ],
            out_specs=pl.BlockSpec((TILE_M, OUT), lambda i: (i, 0)),
            compiler_params=pltpu.CompilerParams(
                dimension_semantics=("parallel",)),
            cost_estimate=_cost_estimate(Mp),
        )(x2d_p, packed_params)
        out2d = out2d[:M, :]

    return out2d.reshape(B, S, OUT)


def _reference(x, w1, b1, w2, b2):
    h = jnp.maximum(jnp.einsum("bsk,hk->bsh", x, w1) + b1, 0.0)
    return jnp.einsum("bsh,oh->bso", h, w2) + b2


if __name__ == "__main__":
    key = jax.random.PRNGKey(0)
    k_x, k_w1, k_b1, k_w2, k_b2 = jax.random.split(key, 5)

    B, S = 1, 4  # matches ApexModel.get_dummy_input(): (1, 4, 32)

    x = jax.random.normal(k_x, (B, S, IN), dtype=jnp.float32)
    # PyTorch Linear convention: W is (out_features, in_features).
    w1 = jax.random.normal(k_w1, (HID, IN), dtype=jnp.float32) * (1.0 / jnp.sqrt(IN))
    b1 = jax.random.normal(k_b1, (HID,), dtype=jnp.float32) * 0.01
    w2 = jax.random.normal(k_w2, (OUT, HID), dtype=jnp.float32) * (1.0 / jnp.sqrt(HID))
    b2 = jax.random.normal(k_b2, (OUT,), dtype=jnp.float32) * 0.01

    # One-time parameter packing (init-time, outside the per-call path).
    params = pack_apex_params(w1, b1, w2, b2)
    jax.block_until_ready(params)

    out = apex_model_forward(x, params)
    jax.block_until_ready(out)

    ref = _reference(x, w1, b1, w2, b2)
    assert out.shape == (B, S, OUT), out.shape
    assert jnp.allclose(out, ref, atol=1e-4, rtol=1e-4), "mismatch vs reference"

    print("KERNEL_OK")
</pallas_src>

<mosaic_0001>
module attributes {stable_mosaic.version = 11 : i64} {
  func.func @_fused_mlp_kernel(%arg0: memref<4x32xf32, #tpu.memory_space<vmem>>, %arg1: memref<112x64xf32, #tpu.memory_space<vmem>>, %arg2: memref<4x32xf32, #tpu.memory_space<vmem>>) attributes {dimension_semantics = [], scalar_prefetch = 0 : i64, scratch_operands = 0 : i64, tpu.core_type = #tpu.core_type<tc>} {
    %c0 = arith.constant 0 : index
    %c0_0 = arith.constant 0 : index
    %0 = vector.load %arg1[%c0, %c0_0] : memref<112x64xf32, #tpu.memory_space<vmem>>, vector<32x64xf32>
    %c32 = arith.constant 32 : index
    %c0_1 = arith.constant 0 : index
    %1 = vector.load %arg1[%c32, %c0_1] : memref<112x64xf32, #tpu.memory_space<vmem>>, vector<1x64xf32>
    %c40 = arith.constant 40 : index
    %c0_2 = arith.constant 0 : index
    %2 = vector.load %arg1[%c40, %c0_2] : memref<112x64xf32, #tpu.memory_space<vmem>>, vector<64x32xf32>
    %c104 = arith.constant 104 : index
    %c0_3 = arith.constant 0 : index
    %3 = vector.load %arg1[%c104, %c0_3] : memref<112x64xf32, #tpu.memory_space<vmem>>, vector<1x32xf32>
    %c0_4 = arith.constant 0 : index
    %c0_5 = arith.constant 0 : index
    %4 = vector.load %arg0[%c0_4, %c0_5] : memref<4x32xf32, #tpu.memory_space<vmem>>, vector<4x32xf32>
    %cst = arith.constant dense<0.000000e+00> : vector<4x64xf32>
    %5 = tpu.matmul %4, %0, %cst {dimension_numbers = #tpu.dot_dimension_numbers<[1], [0], [0], [1], [0, 0, 1, 1], [], []>} : vector<4x32xf32>, vector<32x64xf32>, vector<4x64xf32> -> vector<4x64xf32>
    %6 = vector.broadcast %1 : vector<1x64xf32> to vector<4x64xf32>
    %7 = arith.addf %5, %6 : vector<4x64xf32>
    %cst_6 = arith.constant 0.000000e+00 : f32
    %8 = vector.broadcast %cst_6 : f32 to vector<4x64xf32>
    %9 = arith.maximumf %7, %8 : vector<4x64xf32>
    %cst_7 = arith.constant dense<0.000000e+00> : vector<4x32xf32>
    %10 = tpu.matmul %9, %2, %cst_7 {dimension_numbers = #tpu.dot_dimension_numbers<[1], [0], [0], [1], [0, 0, 1, 1], [], []>} : vector<4x64xf32>, vector<64x32xf32>, vector<4x32xf32> -> vector<4x32xf32>
    %11 = vector.broadcast %3 : vector<1x32xf32> to vector<4x32xf32>
    %12 = arith.addf %10, %11 : vector<4x32xf32>
    %c0_8 = arith.constant 0 : index
    %c0_9 = arith.constant 0 : index
    %13 = vector.load %arg2[%c0_8, %c0_9] : memref<4x32xf32, #tpu.memory_space<vmem>>, vector<4x32xf32>
    tpu.vector_store %arg2[%c0_8, %c0_9], %12 {strides = array<i32>} : memref<4x32xf32, #tpu.memory_space<vmem>>, vector<4x32xf32>,
    return
  }
}

</mosaic_0001>

<llo_original>
// kernel: apex_model_forward.1
$region0: #{apex_model_forward.1}
  #allocation0 [shape = 'u32[]', space=smem, size = 0x4, offset = 0x4, fixed_abs, tag = 'smem constant byte address 0x4 - core index']
  #allocation1 [shape = 'u32[72,128]{1,0:T(1,128)}', space=vmem, size = 0x9000, scoped, tag = 'internal scratch']
  %s0 = inlined_call_operand.vmem [shape: f32[4,32], index: 0, kind: input, shape index: {}]
  %s1 = inlined_call_operand.vmem [shape: f32[112,64], index: 1, kind: input, shape index: {}]
  %s2 = inlined_call_operand.hbm [shape: f32[4,32], index: 2, kind: output, shape index: {}]
  %s3 = sld [smem:[#allocation0]]
  $region18: #{apex_model_forward.1} parent=0
    _
  %s5 = ssub.s32 1, %s3
  %s6 = scalar_select 0, %s5, %s3
  $region1: #{apex_model_forward.1} parent=0
    #allocation2 [shape = 'u8[2048]{0}', space=vmem, size = 0x800, scoped, tag = 'output window, operand 0, single buffered']
    #allocation3 [shape = 's32[1]{0}', space=sflag, size = 0x4, scoped, tag = 'scoped memory for apex_model_forward.1']
    %7 = vsyncpa [#allocation3], 0
    // Predicated region
    $region2: #{apex_model_forward.1} parent=1 // pred_check
      _
    $region3: #{apex_model_forward.1} parent=1 // pred_check_branch
      %9 = sbr.rel (0) target = $region5
    $region4: #{apex_model_forward.1} parent=1 // pred_region
      _
    $region5: #{apex_model_forward.1} parent=1 // pred_fallthru
      _
    // Predicated region
    $region6: #{apex_model_forward.1} parent=1 // pred_check
      _
    $region7: #{apex_model_forward.1} parent=1 // pred_check_branch
      %11 = sbr.rel (0) target = $region9
    $region8: #{apex_model_forward.1} parent=1 // pred_region
      _
    $region9: #{apex_model_forward.1} parent=1 // pred_fallthru
      _
    %v12 = vld [vmem:[%s1] sm:$0xff]
    %v13 = vld [vmem:[%s1 + $0x8] sm:$0xff]
    %v14 = vld [vmem:[%s1 + $0x10] sm:$0xff]
    %v15 = vld [vmem:[%s1 + $0x18] sm:$0xff]
    %v16 = vld [vmem:[%s1 + $0x20] sm:$0x1]
    %v17 = vld [vmem:[%s1 + $0x28] sm:$0xff]
    %v18 = vld [vmem:[%s1 + $0x30] sm:$0xff]
    %v19 = vld [vmem:[%s1 + $0x38] sm:$0xff]
    %v20 = vld [vmem:[%s1 + $0x40] sm:$0xff]
    %v21 = vld [vmem:[%s1 + $0x48] sm:$0xff]
    %v22 = vld [vmem:[%s1 + $0x50] sm:$0xff]
    %v23 = vld [vmem:[%s1 + $0x58] sm:$0xff]
    %v24 = vld [vmem:[%s1 + $0x60] sm:$0xff]
    %v25 = vld [vmem:[%s1 + $0x68] sm:$0x1]
    %v26 = vld [vmem:[%s0] sm:$0xf]
    %v27 = vperm.slane %v16, 0
    %vm28 = vcmask 261120
    %v30 = vsel %vm28, %v26, 0
    %32 = vmatpush.msra.mxu0 0.0
    %33 = vmatpush.msra.mxu0 0.0
    %34 = vmatpush.msra.mxu0 0.0
    %35 = vmatpush.msra.mxu0 0.0
    %36 = vmatpush.msra.mxu0 0.0
    %37 = vmatpush.msra.mxu0 0.0
    %38 = vmatpush.msra.mxu0 0.0
    %39 = vmatpush.msra.mxu0 0.0
    %40 = vmatpush.msra.mxu0 0.0
    %41 = vmatpush.msra.mxu0 0.0
    %42 = vmatpush.msra.mxu0 0.0
    %43 = vmatpush.msra.mxu0 0.0
    %44 = vmatpush.msra.mxu0 %v15
    %45 = vmatpush.msra.mxu0 %v14
    %46 = vmatpush.msra.mxu0 %v13
    %47 = vmatpush.msra.mxu0 %v12
    %48 = vmatmul.f32.gmra.mxu0 %v30
    %v49 = vpop.f32.mrf.mxu0
    %v50 = vadd.f32 %v27, %v49
    %51 = vdwg.mxu0
    %v52 = vmax.f32 %v50, 0.0
    %v53 = vperm.slane %v25, 0
    %vm54 = vcmask 523264
    %v56 = vsel %vm54, %v52, 0
    %58 = vmatpush.msra.mxu0 0.0
    %59 = vmatpush.msra.mxu0 0.0
    %60 = vmatpush.msra.mxu0 0.0
    %61 = vmatpush.msra.mxu0 0.0
    %62 = vmatpush.msra.mxu0 0.0
    %63 = vmatpush.msra.mxu0 0.0
    %64 = vmatpush.msra.mxu0 0.0
    %65 = vmatpush.msra.mxu0 0.0
    %66 = vmatpush.msra.mxu0 %v24
    %67 = vmatpush.msra.mxu0 %v23
    %68 = vmatpush.msra.mxu0 %v22
    %69 = vmatpush.msra.mxu0 %v21
    %70 = vmatpush.msra.mxu0 %v20
    %71 = vmatpush.msra.mxu0 %v19
    %72 = vmatpush.msra.mxu0 %v18
    %73 = vmatpush.msra.mxu0 %v17
    %74 = vmatmul.f32.gmra.mxu0 %v56
    %v75 = vpop.f32.mrf.mxu0
    %v76 = vadd.f32 %v53, %v75
    %77 = vdwg.mxu0
    %vm78 = vcmask 257024
    %79 = vst.msk [vmem:[#allocation2] sm:$0xf] %vm78, %v76
    // Predicated region
    $region10: #{apex_model_forward.1} parent=1 // pred_check
      _
    $region11: #{apex_model_forward.1} parent=1 // pred_check_branch
      %81 = sbr.rel (0) target = $region13
    $region12: #{apex_model_forward.1} parent=1 // pred_region
      %83 = vsyncadd [#allocation3], 0
      %s85 = sshll.u32 [#allocation2], 4
      %s86 = int_to_ptr.vmem [resolvable:$true] %s85
      %s87 = sshll.u32 %s2, 4
      %s88 = int_to_ptr.hbm [resolvable:$true] %s87
      %90 = dma.vmem_to_hbm [thread:$0]  %s86, 64, %s88, [#allocation3]
    $region13: #{apex_model_forward.1} parent=1 // pred_fallthru
      _
    // Predicated region
    $region14: #{apex_model_forward.1} parent=1 // pred_check
      _
    $region15: #{apex_model_forward.1} parent=1 // pred_check_branch
      %92 = sbr.rel (0) target = $region17
    $region16: #{apex_model_forward.1} parent=1 // pred_region
      %94 = dma.done [#allocation3], 64
    $region17: #{apex_model_forward.1} parent=1 // pred_fallthru
      _
    %95 = vsyncpa [#allocation3], 1

</llo_original>
